<compile_context>
chip_gen: v5e
topology: v5e:2x2
jax: 0.10.0
libtpu: 0.0.40
codegen_flags: <defaults>
</compile_context>

<pallas_src>
import math

import jax
import jax.numpy as jnp
from jax.experimental import pallas as pl
from jax.experimental.pallas import tpu as pltpu

# ----------------------------- config ---------------------------------------
B = 2          # batch
S = 16         # model_max_length (sequence length)
H = 32         # hidden size
NH = 2         # attention heads
DH = H // NH   # head dim
FFN = 64       # intermediate size
NL = 2         # encoder layers
NS = 8         # max_src_sentences
VOCAB = 50
MAX_POS = 512 + 2   # RoBERTa-style position table (pos_embed=512)
PAD_IDX = 1
LN_EPS = 1e-5
PARAM_DTYPE = jnp.float32    # master params / LN params / biases
ACT_DTYPE = jnp.bfloat16     # activations & matmul weights on the MXU path

# Scoped-VMEM limit with headroom: above v5e's 16 MiB / v6e's 32 MiB scoped
# defaults, below v7x's 64 MiB physical per-TensorCore VMEM.
VMEM_LIMIT_BYTES = 48 * 1024 * 1024


def _row_tile(m, cap=256):
    """Largest multiple-of-8 divisor of m with tm <= min(cap, m//2).

    cap=256 (not 512) so the real-scale FFN working set fits v7x's 64 MiB VMEM;
    the m//2 bound guarantees >= 2 steps on the "parallel" row axis so v7x's
    second TensorCore gets work.  Falls back to full m (block == full dim is
    always layout-legal) only when no such divisor exists.
    """
    if m >= 16:
        limit = min(cap, m // 2)
        for tm in range(limit - limit % 8, 7, -8):
            if m % tm == 0:
                return tm
    return m


def _ffn_k_tile(ffn, cap=1024):
    """FFN reduction-axis tile: full if small, else a 128-aligned divisor."""
    if ffn <= cap:
        return ffn
    for tk in range(cap - cap % 128, 127, -128):
        if ffn % tk == 0:
            return tk
    return ffn


def _probe_const_block_kwargs():
    """pipeline_mode=pl.Buffered(1) for grid-invariant blocks (weights, biases,
    gamma/beta): they never change across the grid, so default double-buffering
    only wastes VMEM (decisive for the 8 MiB w1 at real scale on v7x).
    Probed with a tiny real pallas_call so unsupported jax versions fall back
    cleanly to the default pipelining."""
    try:
        kw = {"pipeline_mode": pl.Buffered(1)}

        def _k(x_ref, c_ref, o_ref):
            o_ref[...] = x_ref[...] + c_ref[...]

        out = pl.pallas_call(
            _k,
            out_shape=jax.ShapeDtypeStruct((16, 128), jnp.float32),
            grid=(2,),
            in_specs=[pl.BlockSpec((8, 128), lambda i: (i, 0)),
                      pl.BlockSpec((8, 128), lambda i: (0, 0), **kw)],
            out_specs=pl.BlockSpec((8, 128), lambda i: (i, 0)),
        )(jnp.zeros((16, 128), jnp.float32), jnp.ones((16, 128), jnp.float32))
        jax.block_until_ready(out)
        return kw
    except Exception:
        return {}


_CONST_KW = _probe_const_block_kwargs()


# ----------------------------- Pallas kernels -------------------------------
def _linear_kernel(x_ref, w_ref, b_ref, o_ref):
    # x: (TM, K) bf16, w: (K, N) bf16, b: (1, N) f32 -> o: (TM, N) bf16
    y = jnp.dot(x_ref[...], w_ref[...], preferred_element_type=jnp.float32)
    o_ref[...] = (y + b_ref[...].astype(jnp.float32)).astype(o_ref.dtype)


def pallas_linear(x2d, w, b):
    """y = x2d @ w + b; x2d [M, K] bf16, w [K, N] bf16, b [N] f32."""
    M, K = x2d.shape
    N = w.shape[1]
    TM = _row_tile(M)
    return pl.pallas_call(
        _linear_kernel,
        out_shape=jax.ShapeDtypeStruct((M, N), ACT_DTYPE),
        grid=(M // TM,),
        in_specs=[
            pl.BlockSpec((TM, K), lambda i: (i, 0)),
            pl.BlockSpec((K, N), lambda i: (0, 0), **_CONST_KW),
            pl.BlockSpec((1, N), lambda i: (0, 0), **_CONST_KW),
        ],
        out_specs=pl.BlockSpec((TM, N), lambda i: (i, 0)),
        compiler_params=pltpu.CompilerParams(
            dimension_semantics=("parallel",),
            vmem_limit_bytes=VMEM_LIMIT_BYTES),
    )(x2d, w, b.reshape(1, N))


def _linear_res_ln_kernel(x_ref, w_ref, b_ref, res_ref, g_ref, bt_ref, o_ref):
    # Fused: y = LayerNorm(x @ w + b + residual) * gamma + beta  (f32 LN math)
    y = jnp.dot(x_ref[...], w_ref[...], preferred_element_type=jnp.float32)
    y = y + b_ref[...].astype(jnp.float32) + res_ref[...].astype(jnp.float32)
    mu = jnp.mean(y, axis=-1, keepdims=True)
    var = jnp.mean((y - mu) ** 2, axis=-1, keepdims=True)
    y = (y - mu) * jax.lax.rsqrt(var + LN_EPS)
    o_ref[...] = (y * g_ref[...] + bt_ref[...]).astype(o_ref.dtype)


def pallas_linear_res_ln(x2d, w, b, res2d, gamma, beta):
    """LayerNorm((x2d @ w + b) + res2d) with f32 LN math, bf16 output."""
    M, K = x2d.shape
    N = w.shape[1]
    TM = _row_tile(M)
    return pl.pallas_call(
        _linear_res_ln_kernel,
        out_shape=jax.ShapeDtypeStruct((M, N), ACT_DTYPE),
        grid=(M // TM,),
        in_specs=[
            pl.BlockSpec((TM, K), lambda i: (i, 0)),
            pl.BlockSpec((K, N), lambda i: (0, 0), **_CONST_KW),
            pl.BlockSpec((1, N), lambda i: (0, 0), **_CONST_KW),
            pl.BlockSpec((TM, N), lambda i: (i, 0)),
            pl.BlockSpec((1, N), lambda i: (0, 0), **_CONST_KW),
            pl.BlockSpec((1, N), lambda i: (0, 0), **_CONST_KW),
        ],
        out_specs=pl.BlockSpec((TM, N), lambda i: (i, 0)),
        compiler_params=pltpu.CompilerParams(
            dimension_semantics=("parallel",),
            vmem_limit_bytes=VMEM_LIMIT_BYTES),
    )(x2d, w, b.reshape(1, N), res2d, gamma.reshape(1, N), beta.reshape(1, N))


def _ffn_kernel(x_ref, w1_ref, b1_ref, w2_ref, b2_ref, g_ref, bt_ref,
                o_ref, acc_ref):
    # Fused FFN block: h2 = LN2( GELU(x @ w1 + b1) @ w2 + b2 + x )
    # Grid axis 1 streams the FFN dimension; the (TM, FFN) GELU intermediate
    # lives only as a per-K-tile VMEM value, never in HBM.
    k = pl.program_id(1)

    @pl.when(k == 0)
    def _():
        acc_ref[...] = jnp.zeros_like(acc_ref)

    u = jnp.dot(x_ref[...], w1_ref[...], preferred_element_type=jnp.float32)
    u = u + b1_ref[...].astype(jnp.float32)
    # torch.nn.GELU default (exact erf).  approximate=True (tanh -> EUP slot)
    # is a per-chip perf knob if the small numeric deviation is acceptable.
    u = jax.nn.gelu(u, approximate=False)
    acc_ref[...] += jnp.dot(u.astype(x_ref.dtype), w2_ref[...],
                            preferred_element_type=jnp.float32)

    @pl.when(k == pl.num_programs(1) - 1)
    def _():
        y = (acc_ref[...] + b2_ref[...].astype(jnp.float32)
             + x_ref[...].astype(jnp.float32))           # residual = x itself
        mu = jnp.mean(y, axis=-1, keepdims=True)
        var = jnp.mean((y - mu) ** 2, axis=-1, keepdims=True)
        y = (y - mu) * jax.lax.rsqrt(var + LN_EPS)
        o_ref[...] = (y * g_ref[...] + bt_ref[...]).astype(o_ref.dtype)


def pallas_ffn_block(h1, w1, b1, w2, b2, gamma, beta):
    """One pallas_call for w1+GELU, w2, residual add and LN2."""
    M, Hd = h1.shape
    FF = w1.shape[1]
    TM = _row_tile(M)
    TK = _ffn_k_tile(FF)
    return pl.pallas_call(
        _ffn_kernel,
        out_shape=jax.ShapeDtypeStruct((M, Hd), ACT_DTYPE),
        grid=(M // TM, FF // TK),
        in_specs=[
            pl.BlockSpec((TM, Hd), lambda i, k: (i, 0)),            # x / residual
            pl.BlockSpec((Hd, TK), lambda i, k: (0, k)),            # w1 column tile
            pl.BlockSpec((1, TK), lambda i, k: (0, k)),             # b1 tile
            pl.BlockSpec((TK, Hd), lambda i, k: (k, 0)),            # w2 row tile
            pl.BlockSpec((1, Hd), lambda i, k: (0, 0), **_CONST_KW),
            pl.BlockSpec((1, Hd), lambda i, k: (0, 0), **_CONST_KW),
            pl.BlockSpec((1, Hd), lambda i, k: (0, 0), **_CONST_KW),
        ],
        out_specs=pl.BlockSpec((TM, Hd), lambda i, k: (i, 0)),
        scratch_shapes=[pltpu.VMEM((TM, Hd), jnp.float32)],
        compiler_params=pltpu.CompilerParams(
            dimension_semantics=("parallel", "arbitrary"),
            vmem_limit_bytes=VMEM_LIMIT_BYTES),
    )(h1, w1, b1.reshape(1, FF), w2, b2.reshape(1, Hd),
      gamma.reshape(1, Hd), beta.reshape(1, Hd))


def _emb_ln_kernel(we_ref, pe_ref, te_ref, g_ref, b_ref, o_ref):
    # Fused: LayerNorm(word_emb + pos_emb + type_emb) — the adds ride in the
    # LN kernel's VPU slack; no materialized f32 `emb` round trip to HBM.
    x = (we_ref[...].astype(jnp.float32) + pe_ref[...].astype(jnp.float32)
         + te_ref[...].astype(jnp.float32))
    mu = jnp.mean(x, axis=-1, keepdims=True)
    var = jnp.mean((x - mu) ** 2, axis=-1, keepdims=True)
    y = (x - mu) * jax.lax.rsqrt(var + LN_EPS)
    o_ref[...] = (y * g_ref[...] + b_ref[...]).astype(o_ref.dtype)


def pallas_embed_ln(we2, pe2, type_row, gamma, beta):
    M, Hd = we2.shape
    TM = _row_tile(M)
    return pl.pallas_call(
        _emb_ln_kernel,
        out_shape=jax.ShapeDtypeStruct((M, Hd), ACT_DTYPE),
        grid=(M // TM,),
        in_specs=[
            pl.BlockSpec((TM, Hd), lambda i: (i, 0)),
            pl.BlockSpec((TM, Hd), lambda i: (i, 0)),
            pl.BlockSpec((1, Hd), lambda i: (0, 0), **_CONST_KW),
            pl.BlockSpec((1, Hd), lambda i: (0, 0), **_CONST_KW),
            pl.BlockSpec((1, Hd), lambda i: (0, 0), **_CONST_KW),
        ],
        out_specs=pl.BlockSpec((TM, Hd), lambda i: (i, 0)),
        compiler_params=pltpu.CompilerParams(
            dimension_semantics=("parallel",),
            vmem_limit_bytes=VMEM_LIMIT_BYTES),
    )(we2, pe2, type_row, gamma.reshape(1, Hd), beta.reshape(1, Hd))


def _attn_kernel(qkv_ref, bias_ref, o_ref):
    # Per batch element: qkv block (1, S, 3H) bf16 with heads packed on lanes
    # (scale 1/sqrt(DH) already folded into the Q projection); bias (1, 1, S)
    # f32 additive key-padding bias broadcasting over query rows.
    qkv = qkv_ref[0]                 # (S, 3H) bf16
    bias = bias_ref[0]               # (1, S)  f32
    for h in range(NH):
        q = qkv[:, h * DH:(h + 1) * DH]
        k = qkv[:, H + h * DH:H + (h + 1) * DH]
        v = qkv[:, 2 * H + h * DH:2 * H + (h + 1) * DH]
        # Contract K's last dim directly — no XLU transpose of k.T on the way
        # to the MXU.
        s = jax.lax.dot_general(q, k,
                                dimension_numbers=(((1,), (1,)), ((), ())),
                                preferred_element_type=jnp.float32)   # (S, S)
        s = s + bias
        m = jnp.max(s, axis=-1, keepdims=True)
        p = jnp.exp(s - m)
        l = jnp.sum(p, axis=-1, keepdims=True)
        p = p * pl.reciprocal(l, approx=True)        # EUP slot; ~2^-12 rel err
        o = jnp.dot(p.astype(v.dtype), v,
                    preferred_element_type=jnp.float32)               # (S, DH)
        # Write each head straight into its lane slice of the output: no
        # concat, only one head's scores/output live at a time (no vreg spills
        # at real NH=16).
        o_ref[0, :, h * DH:(h + 1) * DH] = o.astype(o_ref.dtype)
    # TODO(synk): at real S (>=512) replace with a flash-style kernel (KV grid
    # axis "arbitrary" + m/l/acc VMEM scratch, bias tiled (1,1,TK)) so the SxS
    # scores are never materialized; at real DH=64 also reorder the fused QKV
    # columns in prepare_params so each head's lane window is 128-aligned.


def pallas_attention(qkv, attn_bias):
    # qkv: [B, S, 3H] bf16; attn_bias: [B, 1, S] f32 -> [B, S, H] bf16.
    return pl.pallas_call(
        _attn_kernel,
        out_shape=jax.ShapeDtypeStruct((B, S, H), ACT_DTYPE),
        grid=(B,),
        in_specs=[
            pl.BlockSpec((1, S, 3 * H), lambda b: (b, 0, 0)),
            pl.BlockSpec((1, 1, S), lambda b: (b, 0, 0)),
        ],
        out_specs=pl.BlockSpec((1, S, H), lambda b: (b, 0, 0)),
        compiler_params=pltpu.CompilerParams(
            dimension_semantics=("parallel",),
            vmem_limit_bytes=VMEM_LIMIT_BYTES),
    )(qkv, attn_bias)


def _classifier_kernel(x_ref, m_ref, w_ref, b_ref, o_ref):
    # x: (1, NS, H) bf16; m: (1, NS) f32; w: (1, H) f32; b: (1, 1) f32.
    x = x_ref[...].astype(jnp.float32)
    m = m_ref[...].astype(jnp.float32)
    x = x * m[:, :, None]                                   # sents_vec * cls_mask
    w = w_ref[...].astype(jnp.float32)
    h = jnp.sum(x * w[None, :, :], axis=-1) + b_ref[0, 0]   # (1, NS)
    o_ref[...] = (jax.nn.sigmoid(h) * m).astype(o_ref.dtype)


def pallas_classifier(sents_vec, cls_mask, w, b):
    return pl.pallas_call(
        _classifier_kernel,
        out_shape=jax.ShapeDtypeStruct((B, NS), jnp.float32),
        grid=(B,),
        in_specs=[
            pl.BlockSpec((1, NS, H), lambda i: (i, 0, 0)),
            pl.BlockSpec((1, NS), lambda i: (i, 0)),
            pl.BlockSpec((1, H), lambda i: (0, 0), **_CONST_KW),
            pl.BlockSpec((1, 1), lambda i: (0, 0), **_CONST_KW),
        ],
        out_specs=pl.BlockSpec((1, NS), lambda i: (i, 0)),
        compiler_params=pltpu.CompilerParams(
            dimension_semantics=("parallel",)),
    )(sents_vec, cls_mask, w.reshape(1, H), b.reshape(1, 1))


# ----------------------------- parameters -----------------------------------
def init_params(key):
    std = 0.02
    keys = iter(jax.random.split(key, 4 + NL * 16 + 4))

    def nrm(shape):
        return (std * jax.random.normal(next(keys), shape)).astype(PARAM_DTYPE)

    p = {
        "word_emb": nrm((VOCAB, H)),
        "pos_emb": nrm((MAX_POS, H)),
        "type_emb": nrm((1, H)),
        "emb_ln_g": jnp.ones((H,), PARAM_DTYPE),
        "emb_ln_b": jnp.zeros((H,), PARAM_DTYPE),
        "layers": [],
    }
    for _l in range(NL):
        layer = {
            "wq": nrm((H, H)), "bq": nrm((H,)),
            "wk": nrm((H, H)), "bk": nrm((H,)),
            "wv": nrm((H, H)), "bv": nrm((H,)),
            "wo": nrm((H, H)), "bo": nrm((H,)),
            "ln1_g": jnp.ones((H,), PARAM_DTYPE), "ln1_b": jnp.zeros((H,), PARAM_DTYPE),
            "w1": nrm((H, FFN)), "b1": nrm((FFN,)),
            "w2": nrm((FFN, H)), "b2": nrm((H,)),
            "ln2_g": jnp.ones((H,), PARAM_DTYPE), "ln2_b": jnp.zeros((H,), PARAM_DTYPE),
        }
        p["layers"].append(layer)
    p["cls_w"] = nrm((H,))        # Classifier: Linear(hidden, 1)
    p["cls_b"] = nrm(())
    return p
    # TODO(synk): pretrained-checkpoint loading / pos-embed resize is a
    # weight-init concern, not a kernel concern; weights here are synthetic.


def prepare_params(p):
    """Fuse QKV, fold 1/sqrt(DH) into Q weights, cast matmul weights to bf16."""
    inv = 1.0 / math.sqrt(DH)
    out = {
        "word_emb": p["word_emb"],
        "pos_emb": p["pos_emb"],
        "type_emb": p["type_emb"],
        "emb_ln_g": p["emb_ln_g"], "emb_ln_b": p["emb_ln_b"],
        "cls_w": p["cls_w"], "cls_b": p["cls_b"],
        "layers": [],
    }
    for lp in p["layers"]:
        out["layers"].append({
            "w_qkv": jnp.concatenate(
                [lp["wq"] * inv, lp["wk"], lp["wv"]], axis=1).astype(ACT_DTYPE),
            "b_qkv": jnp.concatenate(
                [lp["bq"] * inv, lp["bk"], lp["bv"]], axis=0).astype(jnp.float32),
            "wo": lp["wo"].astype(ACT_DTYPE), "bo": lp["bo"],
            "w1": lp["w1"].astype(ACT_DTYPE), "b1": lp["b1"],
            "w2": lp["w2"].astype(ACT_DTYPE), "b2": lp["b2"],
            "ln1_g": lp["ln1_g"], "ln1_b": lp["ln1_b"],
            "ln2_g": lp["ln2_g"], "ln2_b": lp["ln2_b"],
        })
    return out


# ----------------------------- model forward --------------------------------
def encoder_layer(x2, lp, attn_bias):
    """x2: [B*S, H] bf16 -> [B*S, H] bf16. 4 pallas_calls total."""
    qkv = pallas_linear(x2, lp["w_qkv"], lp["b_qkv"])                 # [M, 3H]
    ctx = pallas_attention(qkv.reshape(B, S, 3 * H), attn_bias)       # [B, S, H]
    h1 = pallas_linear_res_ln(ctx.reshape(B * S, H), lp["wo"], lp["bo"],
                              x2, lp["ln1_g"], lp["ln1_b"])           # wo+res+LN1
    h2 = pallas_ffn_block(h1, lp["w1"], lp["b1"], lp["w2"], lp["b2"],
                          lp["ln2_g"], lp["ln2_b"])                   # fused FFN
    return h2


def xlm_roberta_ext_forward(params, src_ids, src_mask, cls_ids, cls_mask):
    """src_ids/src_mask: [B, S]; cls_ids/cls_mask: [B, NS] -> scores [B, NS]."""
    maskf = src_mask.astype(jnp.float32)

    # --- embeddings: data-dependent gathers stay in JAX; add + LN fused in Pallas.
    # RoBERTa-style position ids: cumsum over non-pad positions + padding_idx.
    pos_ids = (jnp.cumsum(src_mask, axis=1) * src_mask).astype(jnp.int32) + PAD_IDX
    we = jnp.take(params["word_emb"], src_ids, axis=0).reshape(B * S, H)
    pe = jnp.take(params["pos_emb"], pos_ids, axis=0).reshape(B * S, H)
    x2 = pallas_embed_ln(we, pe, params["type_emb"],
                         params["emb_ln_g"], params["emb_ln_b"])      # bf16

    # additive attention bias from src_mask: 0 where valid, -1e9 where padded.
    # (Safe only because every row has >=1 valid key; guard if inputs can be
    # fully padded.)
    attn_bias = ((maskf - 1.0) * 1e9).reshape(B, 1, S)

    for lp in params["layers"]:
        x2 = encoder_layer(x2, lp, attn_bias)
    x = x2.reshape(B, S, H)

    # --- gather CLS-token vectors per sentence (JAX glue, data-dependent gather)
    sents_vec = jnp.take_along_axis(x, cls_ids[:, :, None], axis=1)   # (B, NS, H)

    # --- Classifier (mask-mul + linear(H->1) + sigmoid + mask) fused in Pallas
    scores = pallas_classifier(sents_vec, cls_mask.astype(jnp.float32),
                               params["cls_w"], params["cls_b"])
    return scores


# ----------------------------- main ------------------------------------------
if __name__ == "__main__":
    key = jax.random.PRNGKey(0)
    kp, k1, k2, k3, k4 = jax.random.split(key, 5)

    params = prepare_params(init_params(kp))

    src_ids = jax.random.randint(k1, (B, S), 2, VOCAB, dtype=jnp.int32)
    src_mask = jnp.ones((B, S), dtype=jnp.int32)
    src_mask = src_mask.at[1, S - 4:].set(0)                 # some padding in batch 1
    src_ids = jnp.where(src_mask == 1, src_ids, PAD_IDX)

    cls_ids = jnp.sort(jax.random.randint(k2, (B, NS), 0, S - 4, dtype=jnp.int32),
                       axis=1)
    cls_mask = (jax.random.uniform(k3, (B, NS)) > 0.25).astype(jnp.float32)

    scores = xlm_roberta_ext_forward(params, src_ids, src_mask, cls_ids, cls_mask)
    scores = jax.block_until_ready(scores)

    assert scores.shape == (B, NS), scores.shape
    assert bool(jnp.all(jnp.isfinite(scores)))
    print("KERNEL_OK")
</pallas_src>

<mosaic_0001>
module attributes {stable_mosaic.version = 11 : i64} {
  func.func @_k(%arg0: i32, %arg1: memref<8x128xf32, #tpu.memory_space<vmem>>, %arg2: memref<8x128xf32, #tpu.memory_space<vmem>>, %arg3: memref<8x128xf32, #tpu.memory_space<vmem>>) attributes {dimension_semantics = [#tpu.dimension_semantics<arbitrary>], iteration_bounds = array<i64: 2>, scalar_prefetch = 0 : i64, scratch_operands = 0 : i64, tpu.core_type = #tpu.core_type<tc>, window_params = [{transform_indices = @transform_0, window_bounds = array<i64: 8, 128>}, {pipeline_mode = #tpu.pipeline_mode<synchronous>, transform_indices = @transform_1, window_bounds = array<i64: 8, 128>}, {transform_indices = @transform_2, window_bounds = array<i64: 8, 128>}]} {
    %c0 = arith.constant 0 : index
    %c0_0 = arith.constant 0 : index
    %0 = vector.load %arg1[%c0, %c0_0] : memref<8x128xf32, #tpu.memory_space<vmem>>, vector<8x128xf32>
    %c0_1 = arith.constant 0 : index
    %c0_2 = arith.constant 0 : index
    %1 = vector.load %arg2[%c0_1, %c0_2] : memref<8x128xf32, #tpu.memory_space<vmem>>, vector<8x128xf32>
    %2 = arith.addf %0, %1 : vector<8x128xf32>
    %c0_3 = arith.constant 0 : index
    %c0_4 = arith.constant 0 : index
    %3 = vector.load %arg3[%c0_3, %c0_4] : memref<8x128xf32, #tpu.memory_space<vmem>>, vector<8x128xf32>
    tpu.vector_store %arg3[%c0_3, %c0_4], %2 {strides = array<i32>} : memref<8x128xf32, #tpu.memory_space<vmem>>, vector<8x128xf32>,
    return
  }
  func.func @transform_0(%arg0: i32) -> (i32, i32) {
    %c0_i32 = arith.constant 0 : i32
    %c0_i32_0 = arith.constant 0 : i32
    return %arg0, %c0_i32 : i32, i32
  }
  func.func @transform_1(%arg0: i32) -> (i32, i32) {
    %c0_i32 = arith.constant 0 : i32
    %c0_i32_0 = arith.constant 0 : i32
    %c0_i32_1 = arith.constant 0 : i32
    return %c0_i32, %c0_i32_0 : i32, i32
  }
  func.func @transform_2(%arg0: i32) -> (i32, i32) {
    %c0_i32 = arith.constant 0 : i32
    %c0_i32_0 = arith.constant 0 : i32
    return %arg0, %c0_i32 : i32, i32
  }
}

module attributes {stable_mosaic.version = 11 : i64} {
  func.func @_emb_ln_kernel(%arg0: i32, %arg1: memref<16x32xf32, #tpu.memory_space<vmem>>, %arg2: memref<16x32xf32, #tpu.memory_space<vmem>>, %arg3: memref<1x32xf32, #tpu.memory_space<vmem>>, %arg4: memref<1x32xf32, #tpu.memory_space<vmem>>, %arg5: memref<1x32xf32, #tpu.memory_space<vmem>>, %arg6: memref<16x32xbf16, #tpu.memory_space<vmem>>) attributes {dimension_semantics = [#tpu.dimension_semantics<parallel>], iteration_bounds = array<i64: 2>, scalar_prefetch = 0 : i64, scratch_operands = 0 : i64, tpu.core_type = #tpu.core_type<tc>, window_params = [{transform_indices = @transform_0, window_bounds = array<i64: 16, 32>}, {transform_indices = @transform_1, window_bounds = array<i64: 16, 32>}, {pipeline_mode = #tpu.pipeline_mode<synchronous>, transform_indices = @transform_2, window_bounds = array<i64: 1, 32>}, {pipeline_mode = #tpu.pipeline_mode<synchronous>, transform_indices = @transform_3, window_bounds = array<i64: 1, 32>}, {pipeline_mode = #tpu.pipeline_mode<synchronous>, transform_indices = @transform_4, window_bounds = array<i64: 1, 32>}, {transform_indices = @transform_5, window_bounds = array<i64: 16, 32>}]} {
    %c0 = arith.constant 0 : index
    %c0_0 = arith.constant 0 : index
    %0 = vector.load %arg1[%c0, %c0_0] : memref<16x32xf32, #tpu.memory_space<vmem>>, vector<16x32xf32>
    %c0_1 = arith.constant 0 : index
    %c0_2 = arith.constant 0 : index
    %1 = vector.load %arg2[%c0_1, %c0_2] : memref<16x32xf32, #tpu.memory_space<vmem>>, vector<16x32xf32>
    %2 = arith.addf %0, %1 : vector<16x32xf32>
    %c0_3 = arith.constant 0 : index
    %c0_4 = arith.constant 0 : index
    %3 = vector.load %arg3[%c0_3, %c0_4] : memref<1x32xf32, #tpu.memory_space<vmem>>, vector<1x32xf32>
    %4 = vector.broadcast %3 : vector<1x32xf32> to vector<16x32xf32>
    %5 = arith.addf %2, %4 : vector<16x32xf32>
    %cst = arith.constant dense<0.000000e+00> : vector<16xf32>
    %6 = vector.multi_reduction <add>, %5, %cst [1] : vector<16x32xf32> to vector<16xf32>
    %7 = vector.shape_cast %6 : vector<16xf32> to vector<16x1xf32>
    %cst_5 = arith.constant 3.200000e+01 : f32
    %8 = vector.broadcast %cst_5 : f32 to vector<16x1xf32>
    %9 = arith.divf %7, %8 : vector<16x1xf32>
    %10 = vector.broadcast %9 : vector<16x1xf32> to vector<16x32xf32>
    %11 = arith.subf %5, %10 : vector<16x32xf32>
    %12 = arith.mulf %11, %11 : vector<16x32xf32>
    %cst_6 = arith.constant dense<0.000000e+00> : vector<16xf32>
    %13 = vector.multi_reduction <add>, %12, %cst_6 [1] : vector<16x32xf32> to vector<16xf32>
    %14 = vector.shape_cast %13 : vector<16xf32> to vector<16x1xf32>
    %cst_7 = arith.constant 3.200000e+01 : f32
    %15 = vector.broadcast %cst_7 : f32 to vector<16x1xf32>
    %16 = arith.divf %14, %15 : vector<16x1xf32>
    %17 = vector.broadcast %9 : vector<16x1xf32> to vector<16x32xf32>
    %18 = arith.subf %5, %17 : vector<16x32xf32>
    %cst_8 = arith.constant 9.99999974E-6 : f32
    %19 = vector.broadcast %cst_8 : f32 to vector<16x1xf32>
    %20 = arith.addf %16, %19 : vector<16x1xf32>
    %21 = math.rsqrt %20 : vector<16x1xf32>
    %22 = vector.broadcast %21 : vector<16x1xf32> to vector<16x32xf32>
    %23 = arith.mulf %18, %22 : vector<16x32xf32>
    %c0_9 = arith.constant 0 : index
    %c0_10 = arith.constant 0 : index
    %24 = vector.load %arg4[%c0_9, %c0_10] : memref<1x32xf32, #tpu.memory_space<vmem>>, vector<1x32xf32>
    %25 = vector.broadcast %24 : vector<1x32xf32> to vector<16x32xf32>
    %26 = arith.mulf %23, %25 : vector<16x32xf32>
    %c0_11 = arith.constant 0 : index
    %c0_12 = arith.constant 0 : index
    %27 = vector.load %arg5[%c0_11, %c0_12] : memref<1x32xf32, #tpu.memory_space<vmem>>, vector<1x32xf32>
    %28 = vector.broadcast %27 : vector<1x32xf32> to vector<16x32xf32>
    %29 = arith.addf %26, %28 : vector<16x32xf32>
    %30 = arith.truncf %29 : vector<16x32xf32> to vector<16x32xbf16>
    %c0_13 = arith.constant 0 : index
    %c0_14 = arith.constant 0 : index
    %31 = vector.load %arg6[%c0_13, %c0_14] : memref<16x32xbf16, #tpu.memory_space<vmem>>, vector<16x32xbf16>
    tpu.vector_store %arg6[%c0_13, %c0_14], %30 {strides = array<i32>} : memref<16x32xbf16, #tpu.memory_space<vmem>>, vector<16x32xbf16>,
    return
  }
  func.func @transform_0(%arg0: i32) -> (i32, i32) {
    %c0_i32 = arith.constant 0 : i32
    %c0_i32_0 = arith.constant 0 : i32
    return %arg0, %c0_i32 : i32, i32
  }
  func.func @transform_1(%arg0: i32) -> (i32, i32) {
    %c0_i32 = arith.constant 0 : i32
    %c0_i32_0 = arith.constant 0 : i32
    return %arg0, %c0_i32 : i32, i32
  }
  func.func @transform_2(%arg0: i32) -> (i32, i32) {
    %c0_i32 = arith.constant 0 : i32
    %c0_i32_0 = arith.constant 0 : i32
    %c0_i32_1 = arith.constant 0 : i32
    return %c0_i32, %c0_i32_0 : i32, i32
  }
  func.func @transform_3(%arg0: i32) -> (i32, i32) {
    %c0_i32 = arith.constant 0 : i32
    %c0_i32_0 = arith.constant 0 : i32
    %c0_i32_1 = arith.constant 0 : i32
    return %c0_i32, %c0_i32_0 : i32, i32
  }
  func.func @transform_4(%arg0: i32) -> (i32, i32) {
    %c0_i32 = arith.constant 0 : i32
    %c0_i32_0 = arith.constant 0 : i32
    %c0_i32_1 = arith.constant 0 : i32
    return %c0_i32, %c0_i32_0 : i32, i32
  }
  func.func @transform_5(%arg0: i32) -> (i32, i32) {
    %c0_i32 = arith.constant 0 : i32
    %c0_i32_0 = arith.constant 0 : i32
    return %arg0, %c0_i32 : i32, i32
  }
}

</mosaic_0001>

<llo_original>
// kernel: tpu_custom_call.1
$region0: #{tpu_custom_call.1}
  #allocation0 [shape = 'u32[]', space=smem, size = 0x4, offset = 0x4, fixed_abs, tag = 'smem constant byte address 0x4 - core index']
  #allocation1 [shape = 'u32[72,128]{1,0:T(1,128)}', space=vmem, size = 0x9000, scoped, tag = 'internal scratch']
  %s0 = inlined_call_operand.hbm [shape: f32[16,128], index: 0, kind: input, shape index: {}]
  %s1 = inlined_call_operand.hbm [shape: f32[16,128], index: 1, kind: input, shape index: {}]
  %s2 = inlined_call_operand.hbm [shape: f32[16,128], index: 2, kind: output, shape index: {}]
  %s3 = sld [smem:[#allocation0]]
  $region49: #{tpu_custom_call.1} parent=0
    _
  %s5 = ssub.s32 1, %s3
  %s6 = scalar_select 0, %s5, %s3
  $region1: #{tpu_custom_call.1} parent=0
    #allocation2 [shape = 'u8[8192]{0}', space=vmem, size = 0x2000, scoped, tag = 'input window, operand 0']
    #allocation3 [shape = 's32[2]{0}', space=sflag, size = 0x8, scoped, tag = 'scoped memory for tpu_custom_call.1']
    #allocation4 [shape = 's32[2]{0}', space=sflag, size = 0x8, scoped, tag = 'scoped memory for tpu_custom_call.1']
    #allocation5 [shape = 'u8[4096]{0}', space=vmem, size = 0x1000, scoped, tag = 'input window, operand 1, single buffered']
    #allocation6 [shape = 's32[1]{0}', space=sflag, size = 0x4, scoped, tag = 'scoped memory for tpu_custom_call.1']
    #allocation7 [shape = 'u8[8192]{0}', space=vmem, size = 0x2000, scoped, tag = 'output window, operand 0']
    %7 = vsyncpa [#allocation3], 0
    %s8 = scalar_lea.sflag [#allocation3], 1
    %9 = vsyncpa %s8, 0
    %10 = vsyncpa [#allocation6], 0
    %11 = vsyncpa [#allocation4], 0
    %s12 = scalar_lea.sflag [#allocation4], 1
    %13 = vsyncpa %s12, 0
    loop: start=0, step=1, limit=4
    $region2: #{tpu_custom_call.1} parent=1 // loop_pre_header
      _
    $region3: #{tpu_custom_call.1} parent=1 // loop_header
      %s15 = sphi 0, %s19
      %p16 = scmp.ge.s32.totalorder %s15, 4
      %s25 = sphi 0, %s27
      %s28 = sphi 0, %s25
      %s29 = sphi 0, %s28
      %s45 = sphi 0, %s29
      %s49 = sphi 0, %s49
      %s51 = sphi 0, %s49
      %s52 = sphi 0, %s51
      %s66 = sphi 0, %s52
      %s72 = sphi 0, %s74
      %s75 = sphi 0, %s72
      %s76 = sphi 0, %s75
      %s92 = sphi 0, %s76
    $region4: #{tpu_custom_call.1} parent=1 // loop_header_branch
      %18 = sbr.rel (%p16) target = $region8
    $region5: #{tpu_custom_call.1} parent=1 // loop_body
      %s20 = ssub.s32 %s15, 1
      %s21 = ssub.s32 %s15, 2
      %s22 = sadd.s32 %s15, 1
      %s23 = ssub.s32 %s15, %s22
      %p24 = scmp.eq.s32.totalorder %s23, 0
      %s26 = sadd.s32 %s25, 1
      %s27 = scalar_select %p24, %s25, %s26
      %p30 = pneg %p24
      %p31 = scmp.eq.s32.totalorder %s15, 1
      %p32 = por %p30, %p31
      %p33 = scmp.ne.s32.totalorder %s25, %s28
      %p34 = scmp.eq.s32.totalorder %s15, 0
      %p35 = por %p33, %p34
      %p36 = scmp.ne.s32.totalorder %s25, %s28
      %p37 = scmp.eq.s32.totalorder %s20, 1
      %p38 = por %p36, %p37
      %p39 = scmp.ne.s32.totalorder %s28, %s29
      %p40 = scmp.eq.s32.totalorder %s20, 0
      %p41 = por %p39, %p40
      %p42 = scmp.ne.s32.totalorder %s28, %s29
      %p43 = scmp.eq.s32.totalorder %s21, 1
      %p44 = por %p42, %p43
      %p46 = scmp.ne.s32.totalorder %s29, %s45
      %p47 = scmp.eq.s32.totalorder %s21, 0
      %p48 = por %p46, %p47
      %s50 = sadd.s32 %s49, 1
      %p53 = scmp.eq.s32.totalorder %s15, 1
      %p54 = scmp.ne.s32.totalorder %s49, %s51
      %p55 = scmp.eq.s32.totalorder %s15, 0
      %p56 = por %p54, %p55
      %p57 = scmp.ne.s32.totalorder %s49, %s51
      %p58 = scmp.eq.s32.totalorder %s20, 1
      %p59 = por %p57, %p58
      %p60 = scmp.ne.s32.totalorder %s51, %s52
      %p61 = scmp.eq.s32.totalorder %s20, 0
      %p62 = por %p60, %p61
      %p63 = scmp.ne.s32.totalorder %s51, %s52
      %p64 = scmp.eq.s32.totalorder %s21, 1
      %p65 = por %p63, %p64
      %p67 = scmp.ne.s32.totalorder %s52, %s66
      %p68 = scmp.eq.s32.totalorder %s21, 0
      %p69 = por %p67, %p68
      %s70 = ssub.s32 %s15, %s22
      %p71 = scmp.eq.s32.totalorder %s70, 0
      %s73 = sadd.s32 %s72, 1
      %s74 = scalar_select %p71, %s72, %s73
      %p77 = pneg %p71
      %p78 = scmp.eq.s32.totalorder %s15, 1
      %p79 = por %p77, %p78
      %p80 = scmp.ne.s32.totalorder %s72, %s75
      %p81 = scmp.eq.s32.totalorder %s15, 0
      %p82 = por %p80, %p81
      %p83 = scmp.ne.s32.totalorder %s72, %s75
      %p84 = scmp.eq.s32.totalorder %s20, 1
      %p85 = por %p83, %p84
      %p86 = scmp.ne.s32.totalorder %s75, %s76
      %p87 = scmp.eq.s32.totalorder %s20, 0
      %p88 = por %p86, %p87
      %p89 = scmp.ne.s32.totalorder %s75, %s76
      %p90 = scmp.eq.s32.totalorder %s21, 1
      %p91 = por %p89, %p90
      %p93 = scmp.ne.s32.totalorder %s76, %s92
      %p94 = scmp.eq.s32.totalorder %s21, 0
      %p95 = por %p93, %p94
      %p96 = scmp.le.s32.totalorder 1, %s15
      %p97 = scmp.lt.s32.totalorder %s15, 3
      %p98 = pnand %p96, %p97
      %p99 = pneg %p98
      // Predicated region
      $region9: #{tpu_custom_call.1} parent=5 // pred_check
        _
      $region10: #{tpu_custom_call.1} parent=5 // pred_check_branch
        %101 = sbr.rel (%p98) target = $region12
      $region11: #{tpu_custom_call.1} parent=5 // pred_region
        %s102 = ssub.s32 %s15, 1
        // Predicated region
        $region13: #{tpu_custom_call.1} parent=11 // pred_check
          %p103 = pneg %p62
        $region14: #{tpu_custom_call.1} parent=11 // pred_check_branch
          %105 = sbr.rel (%p103) target = $region16
        $region15: #{tpu_custom_call.1} parent=11 // pred_region
          %107 = vsyncadd [#allocation6], 0
          %s109 = sshll.u32 %s1, 4
          %s110 = int_to_ptr.hbm [resolvable:$true] %s109
          %s111 = sshll.u32 [#allocation5], 4
          %s112 = int_to_ptr.vmem [resolvable:$true] %s111
          %114 = dma.hbm_to_vmem [thread:$0]  %s110, 128, %s112, [#allocation6]
        $region16: #{tpu_custom_call.1} parent=11 // pred_fallthru
          _
      $region12: #{tpu_custom_call.1} parent=5 // pred_fallthru
        _
      %p115 = scmp.lt.s32.totalorder %s15, 2
      // Predicated region
      $region17: #{tpu_custom_call.1} parent=5 // pred_check
        %p116 = pneg %p115
      $region18: #{tpu_custom_call.1} parent=5 // pred_check_branch
        %118 = sbr.rel (%p116) target = $region20
      $region19: #{tpu_custom_call.1} parent=5 // pred_region
        // Predicated region
        $region21: #{tpu_custom_call.1} parent=19 // pred_check
          %p119 = pneg %p35
        $region22: #{tpu_custom_call.1} parent=19 // pred_check_branch
          %121 = sbr.rel (%p119) target = $region24
        $region23: #{tpu_custom_call.1} parent=19 // pred_region
          %s122 = sand.u32 %s25, 1
          %s123 = scalar_lea.sflag [#allocation3], %s122
          %s124 = sand.u32 %s25, 1
          %s125 = smul.addr %s124, 8
          %s126 = scalar_lea.vmem [#allocation2], %s125
          %128 = vsyncadd %s123, 0
          %s129 = smul.addr %s15, 8
          %s130 = scalar_lea.hbm %s0, %s129
          %s132 = sshll.u32 %s130, 4
          %s133 = int_to_ptr.hbm [resolvable:$true] %s132
          %s134 = sshll.u32 %s126, 4
          %s135 = int_to_ptr.vmem [resolvable:$true] %s134
          %137 = dma.hbm_to_vmem [thread:$0]  %s133, 128, %s135, %s123
        $region24: #{tpu_custom_call.1} parent=19 // pred_fallthru
          _
      $region20: #{tpu_custom_call.1} parent=5 // pred_fallthru
        _
      %p138 = scmp.le.s32.totalorder 1, %s15
      %p139 = scmp.lt.s32.totalorder %s15, 3
      %p140 = pnand %p138, %p139
      %p141 = pneg %p140
      // Predicated region
      $region25: #{tpu_custom_call.1} parent=5 // pred_check
        _
      $region26: #{tpu_custom_call.1} parent=5 // pred_check_branch
        %143 = sbr.rel (%p140) target = $region28
      $region27: #{tpu_custom_call.1} parent=5 // pred_region
        %s144 = ssub.s32 %s15, 1
        %s145 = sand.u32 %s28, 1
        %s146 = scalar_lea.sflag [#allocation3], %s145
        %s147 = sand.u32 %s28, 1
        %s148 = smul.addr %s147, 8
        %s149 = scalar_lea.vmem [#allocation2], %s148
        // Predicated region
        $region29: #{tpu_custom_call.1} parent=27 // pred_check
          %p150 = pneg %p41
        $region30: #{tpu_custom_call.1} parent=27 // pred_check_branch
          %152 = sbr.rel (%p150) target = $region32
        $region31: #{tpu_custom_call.1} parent=27 // pred_region
          %154 = dma.done %s146, 128
        $region32: #{tpu_custom_call.1} parent=27 // pred_fallthru
          _
        // Predicated region
        $region33: #{tpu_custom_call.1} parent=27 // pred_check
          %p155 = pneg %p62
        $region34: #{tpu_custom_call.1} parent=27 // pred_check_branch
          %157 = sbr.rel (%p155) target = $region36
        $region35: #{tpu_custom_call.1} parent=27 // pred_region
          %159 = dma.done [#allocation6], 128
        $region36: #{tpu_custom_call.1} parent=27 // pred_fallthru
          _
        %s160 = sand.u32 %s28, 1
        %s161 = scalar_lea.sflag [#allocation3], %s160
        %s162 = sand.u32 %s28, 1
        %s163 = smul.addr %s162, 8
        %s164 = scalar_lea.vmem [#allocation2], %s163
        %p165 = pneg %p41
        %p166 = pneg %p38
        %p167 = pneg %p62
        %p168 = pneg %p59
        %p169 = pneg %p88
        %p170 = pneg %p85
        %s171 = sand.u32 %s75, 1
        %s172 = scalar_lea.sflag [#allocation4], %s171
        %s173 = sand.u32 %s75, 1
        %s174 = smul.addr %s173, 8
        %s175 = scalar_lea.vmem [#allocation7], %s174
        %v176 = vld [vmem:[%s149] sm:$0xff]
        %v177 = vld [vmem:[#allocation5] sm:$0xff]
        %v178 = vadd.f32 %v176, %v177
        %179 = vst [vmem:[%s175] sm:$0xff] %v178
        %s180 = sand.u32 %s75, 1
        %s181 = scalar_lea.sflag [#allocation4], %s180
        %s182 = sand.u32 %s75, 1
        %s183 = smul.addr %s182, 8
        %s184 = scalar_lea.vmem [#allocation7], %s183
        // Predicated region
        $region37: #{tpu_custom_call.1} parent=27 // pred_check
          %p185 = pneg %p85
        $region38: #{tpu_custom_call.1} parent=27 // pred_check_branch
          %187 = sbr.rel (%p185) target = $region40
        $region39: #{tpu_custom_call.1} parent=27 // pred_region
          %189 = vsyncadd %s181, 0
          %s190 = smul.addr %s20, 8
          %s191 = scalar_lea.hbm %s2, %s190
          %s193 = sshll.u32 %s184, 4
          %s194 = int_to_ptr.vmem [resolvable:$true] %s193
          %s195 = sshll.u32 %s191, 4
          %s196 = int_to_ptr.hbm [resolvable:$true] %s195
          %198 = dma.vmem_to_hbm [thread:$0]  %s194, 128, %s196, %s181
        $region40: #{tpu_custom_call.1} parent=27 // pred_fallthru
          _
      $region28: #{tpu_custom_call.1} parent=5 // pred_fallthru
        _
      %p199 = scmp.le.s32.totalorder 2, %s15
      // Predicated region
      $region41: #{tpu_custom_call.1} parent=5 // pred_check
        %p200 = pneg %p199
      $region42: #{tpu_custom_call.1} parent=5 // pred_check_branch
        %202 = sbr.rel (%p200) target = $region44
      $region43: #{tpu_custom_call.1} parent=5 // pred_region
        %s203 = ssub.s32 %s15, 2
        // Predicated region
        $region45: #{tpu_custom_call.1} parent=43 // pred_check
          %p204 = pneg %p91
        $region46: #{tpu_custom_call.1} parent=43 // pred_check_branch
          %206 = sbr.rel (%p204) target = $region48
        $region47: #{tpu_custom_call.1} parent=43 // pred_region
          %s207 = sand.u32 %s76, 1
          %s208 = scalar_lea.sflag [#allocation4], %s207
          %s209 = sand.u32 %s76, 1
          %s210 = smul.addr %s209, 8
          %s211 = scalar_lea.vmem [#allocation7], %s210
          %213 = dma.done %s208, 128
        $region48: #{tpu_custom_call.1} parent=43 // pred_fallthru
          _
      $region44: #{tpu_custom_call.1} parent=5 // pred_fallthru
        _
    $region6: #{tpu_custom_call.1} parent=1 // loop_footer
      %s19 = sadd.s32 1, %s15
    $region7: #{tpu_custom_call.1} parent=1 // loop_footer_branch
      %14 = sbr.rel target = $region3
    $region8: #{tpu_custom_call.1} parent=1 // loop_exit
      _
    %214 = vsyncpa [#allocation3], 1
    %s215 = scalar_lea.sflag [#allocation3], 1
    %216 = vsyncpa %s215, 1
    %217 = vsyncpa [#allocation6], 1
    %218 = vsyncpa [#allocation4], 1
    %s219 = scalar_lea.sflag [#allocation4], 1
    %220 = vsyncpa %s219, 1

// kernel: tpu_custom_call.1
$region0: #{tpu_custom_call.1}
  #allocation0 [shape = 'u32[]', space=smem, size = 0x4, offset = 0x4, fixed_abs, tag = 'smem constant byte address 0x4 - core index']
  #allocation1 [shape = 'u32[72,128]{1,0:T(1,128)}', space=vmem, size = 0x9000, scoped, tag = 'internal scratch']
  %s0 = inlined_call_operand.hbm [shape: f32[32,32], index: 0, kind: input, shape index: {}]
  %s1 = inlined_call_operand.hbm [shape: f32[32,32], index: 1, kind: input, shape index: {}]
  %s2 = inlined_call_operand.vmem [shape: f32[1,32], index: 2, kind: input, shape index: {}]
  %s3 = inlined_call_operand.vmem [shape: f32[1,32], index: 3, kind: input, shape index: {}]
  %s4 = inlined_call_operand.vmem [shape: f32[1,32], index: 4, kind: input, shape index: {}]
  %s5 = inlined_call_operand.hbm [shape: bf16[32,32], index: 5, kind: output, shape index: {}]
  %s6 = sld [smem:[#allocation0]]
  $region61: #{tpu_custom_call.1} parent=0
    _
  %s8 = ssub.s32 1, %s6
  %s9 = scalar_select 0, %s8, %s6
  $region1: #{tpu_custom_call.1} parent=0
    #allocation2 [shape = 'u8[16384]{0}', space=vmem, size = 0x4000, scoped, tag = 'input window, operand 0']
    #allocation3 [shape = 's32[2]{0}', space=sflag, size = 0x8, scoped, tag = 'scoped memory for tpu_custom_call.1']
    #allocation4 [shape = 's32[2]{0}', space=sflag, size = 0x8, scoped, tag = 'scoped memory for tpu_custom_call.1']
    #allocation5 [shape = 'u8[16384]{0}', space=vmem, size = 0x4000, scoped, tag = 'input window, operand 1']
    #allocation6 [shape = 's32[2]{0}', space=sflag, size = 0x8, scoped, tag = 'scoped memory for tpu_custom_call.1']
    #allocation7 [shape = 'u8[8192]{0}', space=vmem, size = 0x2000, scoped, tag = 'output window, operand 0']
    %10 = vsyncpa [#allocation3], 0
    %s11 = scalar_lea.sflag [#allocation3], 1
    %12 = vsyncpa %s11, 0
    %13 = vsyncpa [#allocation6], 0
    %s14 = scalar_lea.sflag [#allocation6], 1
    %15 = vsyncpa %s14, 0
    %16 = vsyncpa [#allocation4], 0
    %s17 = scalar_lea.sflag [#allocation4], 1
    %18 = vsyncpa %s17, 0
    loop: start=0, step=1, limit=4
    $region2: #{tpu_custom_call.1} parent=1 // loop_pre_header
      _
    $region3: #{tpu_custom_call.1} parent=1 // loop_header
      %s20 = sphi 0, %s24
      %p21 = scmp.ge.s32.totalorder %s20, 4
      %s30 = sphi 0, %s32
      %s33 = sphi 0, %s30
      %s34 = sphi 0, %s33
      %s50 = sphi 0, %s34
      %s56 = sphi 0, %s58
      %s59 = sphi 0, %s56
      %s60 = sphi 0, %s59
      %s76 = sphi 0, %s60
      %s80 = sphi 0, %s80
      %s82 = sphi 0, %s80
      %s83 = sphi 0, %s82
      %s97 = sphi 0, %s83
      %s101 = sphi 0, %s101
      %s103 = sphi 0, %s101
      %s104 = sphi 0, %s103
      %s118 = sphi 0, %s104
      %s122 = sphi 0, %s122
      %s124 = sphi 0, %s122
      %s125 = sphi 0, %s124
      %s139 = sphi 0, %s125
      %s145 = sphi 0, %s147
      %s148 = sphi 0, %s145
      %s149 = sphi 0, %s148
      %s165 = sphi 0, %s149
    $region4: #{tpu_custom_call.1} parent=1 // loop_header_branch
      %23 = sbr.rel (%p21) target = $region8
    $region5: #{tpu_custom_call.1} parent=1 // loop_body
      %s25 = ssub.s32 %s20, 1
      %s26 = ssub.s32 %s20, 2
      %s27 = sadd.s32 %s20, 1
      %s28 = ssub.s32 %s20, %s27
      %p29 = scmp.eq.s32.totalorder %s28, 0
      %s31 = sadd.s32 %s30, 1
      %s32 = scalar_select %p29, %s30, %s31
      %p35 = pneg %p29
      %p36 = scmp.eq.s32.totalorder %s20, 1
      %p37 = por %p35, %p36
      %p38 = scmp.ne.s32.totalorder %s30, %s33
      %p39 = scmp.eq.s32.totalorder %s20, 0
      %p40 = por %p38, %p39
      %p41 = scmp.ne.s32.totalorder %s30, %s33
      %p42 = scmp.eq.s32.totalorder %s25, 1
      %p43 = por %p41, %p42
      %p44 = scmp.ne.s32.totalorder %s33, %s34
      %p45 = scmp.eq.s32.totalorder %s25, 0
      %p46 = por %p44, %p45
      %p47 = scmp.ne.s32.totalorder %s33, %s34
      %p48 = scmp.eq.s32.totalorder %s26, 1
      %p49 = por %p47, %p48
      %p51 = scmp.ne.s32.totalorder %s34, %s50
      %p52 = scmp.eq.s32.totalorder %s26, 0
      %p53 = por %p51, %p52
      %s54 = ssub.s32 %s20, %s27
      %p55 = scmp.eq.s32.totalorder %s54, 0
      %s57 = sadd.s32 %s56, 1
      %s58 = scalar_select %p55, %s56, %s57
      %p61 = pneg %p55
      %p62 = scmp.eq.s32.totalorder %s20, 1
      %p63 = por %p61, %p62
      %p64 = scmp.ne.s32.totalorder %s56, %s59
      %p65 = scmp.eq.s32.totalorder %s20, 0
      %p66 = por %p64, %p65
      %p67 = scmp.ne.s32.totalorder %s56, %s59
      %p68 = scmp.eq.s32.totalorder %s25, 1
      %p69 = por %p67, %p68
      %p70 = scmp.ne.s32.totalorder %s59, %s60
      %p71 = scmp.eq.s32.totalorder %s25, 0
      %p72 = por %p70, %p71
      %p73 = scmp.ne.s32.totalorder %s59, %s60
      %p74 = scmp.eq.s32.totalorder %s26, 1
      %p75 = por %p73, %p74
      %p77 = scmp.ne.s32.totalorder %s60, %s76
      %p78 = scmp.eq.s32.totalorder %s26, 0
      %p79 = por %p77, %p78
      %s81 = sadd.s32 %s80, 1
      %p84 = scmp.eq.s32.totalorder %s20, 1
      %p85 = scmp.ne.s32.totalorder %s80, %s82
      %p86 = scmp.eq.s32.totalorder %s20, 0
      %p87 = por %p85, %p86
      %p88 = scmp.ne.s32.totalorder %s80, %s82
      %p89 = scmp.eq.s32.totalorder %s25, 1
      %p90 = por %p88, %p89
      %p91 = scmp.ne.s32.totalorder %s82, %s83
      %p92 = scmp.eq.s32.totalorder %s25, 0
      %p93 = por %p91, %p92
      %p94 = scmp.ne.s32.totalorder %s82, %s83
      %p95 = scmp.eq.s32.totalorder %s26, 1
      %p96 = por %p94, %p95
      %p98 = scmp.ne.s32.totalorder %s83, %s97
      %p99 = scmp.eq.s32.totalorder %s26, 0
      %p100 = por %p98, %p99
      %s102 = sadd.s32 %s101, 1
      %p105 = scmp.eq.s32.totalorder %s20, 1
      %p106 = scmp.ne.s32.totalorder %s101, %s103
      %p107 = scmp.eq.s32.totalorder %s20, 0
      %p108 = por %p106, %p107
      %p109 = scmp.ne.s32.totalorder %s101, %s103
      %p110 = scmp.eq.s32.totalorder %s25, 1
      %p111 = por %p109, %p110
      %p112 = scmp.ne.s32.totalorder %s103, %s104
      %p113 = scmp.eq.s32.totalorder %s25, 0
      %p114 = por %p112, %p113
      %p115 = scmp.ne.s32.totalorder %s103, %s104
      %p116 = scmp.eq.s32.totalorder %s26, 1
      %p117 = por %p115, %p116
      %p119 = scmp.ne.s32.totalorder %s104, %s118
      %p120 = scmp.eq.s32.totalorder %s26, 0
      %p121 = por %p119, %p120
      %s123 = sadd.s32 %s122, 1
      %p126 = scmp.eq.s32.totalorder %s20, 1
      %p127 = scmp.ne.s32.totalorder %s122, %s124
      %p128 = scmp.eq.s32.totalorder %s20, 0
      %p129 = por %p127, %p128
      %p130 = scmp.ne.s32.totalorder %s122, %s124
      %p131 = scmp.eq.s32.totalorder %s25, 1
      %p132 = por %p130, %p131
      %p133 = scmp.ne.s32.totalorder %s124, %s125
      %p134 = scmp.eq.s32.totalorder %s25, 0
      %p135 = por %p133, %p134
      %p136 = scmp.ne.s32.totalorder %s124, %s125
      %p137 = scmp.eq.s32.totalorder %s26, 1
      %p138 = por %p136, %p137
      %p140 = scmp.ne.s32.totalorder %s125, %s139
      %p141 = scmp.eq.s32.totalorder %s26, 0
      %p142 = por %p140, %p141
      %s143 = ssub.s32 %s20, %s27
      %p144 = scmp.eq.s32.totalorder %s143, 0
      %s146 = sadd.s32 %s145, 1
      %s147 = scalar_select %p144, %s145, %s146
      %p150 = pneg %p144
      %p151 = scmp.eq.s32.totalorder %s20, 1
      %p152 = por %p150, %p151
      %p153 = scmp.ne.s32.totalorder %s145, %s148
      %p154 = scmp.eq.s32.totalorder %s20, 0
      %p155 = por %p153, %p154
      %p156 = scmp.ne.s32.totalorder %s145, %s148
      %p157 = scmp.eq.s32.totalorder %s25, 1
      %p158 = por %p156, %p157
      %p159 = scmp.ne.s32.totalorder %s148, %s149
      %p160 = scmp.eq.s32.totalorder %s25, 0
      %p161 = por %p159, %p160
      %p162 = scmp.ne.s32.totalorder %s148, %s149
      %p163 = scmp.eq.s32.totalorder %s26, 1
      %p164 = por %p162, %p163
      %p166 = scmp.ne.s32.totalorder %s149, %s165
      %p167 = scmp.eq.s32.totalorder %s26, 0
      %p168 = por %p166, %p167
      %p169 = scmp.le.s32.totalorder 1, %s20
      %p170 = scmp.lt.s32.totalorder %s20, 3
      %p171 = pnand %p169, %p170
      %p172 = pneg %p171
      // Predicated region
      $region9: #{tpu_custom_call.1} parent=5 // pred_check
        _
      $region10: #{tpu_custom_call.1} parent=5 // pred_check_branch
        %174 = sbr.rel (%p171) target = $region12
      $region11: #{tpu_custom_call.1} parent=5 // pred_region
        %s175 = ssub.s32 %s20, 1
        // Predicated region
        $region13: #{tpu_custom_call.1} parent=11 // pred_check
          %p176 = pneg %p93
        $region14: #{tpu_custom_call.1} parent=11 // pred_check_branch
          %178 = sbr.rel (%p176) target = $region16
        $region15: #{tpu_custom_call.1} parent=11 // pred_region
          _
        $region16: #{tpu_custom_call.1} parent=11 // pred_fallthru
          _
        // Predicated region
        $region17: #{tpu_custom_call.1} parent=11 // pred_check
          %p179 = pneg %p114
        $region18: #{tpu_custom_call.1} parent=11 // pred_check_branch
          %181 = sbr.rel (%p179) target = $region20
        $region19: #{tpu_custom_call.1} parent=11 // pred_region
          _
        $region20: #{tpu_custom_call.1} parent=11 // pred_fallthru
          _
        // Predicated region
        $region21: #{tpu_custom_call.1} parent=11 // pred_check
          %p182 = pneg %p135
        $region22: #{tpu_custom_call.1} parent=11 // pred_check_branch
          %184 = sbr.rel (%p182) target = $region24
        $region23: #{tpu_custom_call.1} parent=11 // pred_region
          _
        $region24: #{tpu_custom_call.1} parent=11 // pred_fallthru
          _
      $region12: #{tpu_custom_call.1} parent=5 // pred_fallthru
        _
      %p185 = scmp.lt.s32.totalorder %s20, 2
      // Predicated region
      $region25: #{tpu_custom_call.1} parent=5 // pred_check
        %p186 = pneg %p185
      $region26: #{tpu_custom_call.1} parent=5 // pred_check_branch
        %188 = sbr.rel (%p186) target = $region28
      $region27: #{tpu_custom_call.1} parent=5 // pred_region
        // Predicated region
        $region29: #{tpu_custom_call.1} parent=27 // pred_check
          %p189 = pneg %p40
        $region30: #{tpu_custom_call.1} parent=27 // pred_check_branch
          %191 = sbr.rel (%p189) target = $region32
        $region31: #{tpu_custom_call.1} parent=27 // pred_region
          %s192 = sand.u32 %s30, 1
          %s193 = scalar_lea.sflag [#allocation3], %s192
          %s194 = sand.u32 %s30, 1
          %s195 = smul.addr %s194, 16
          %s196 = scalar_lea.vmem [#allocation2], %s195
          %s197 = smul.u32 2, %s20
          %199 = vsyncadd %s193, 0
          %s200 = smul.addr %s197, 8
          %s201 = scalar_lea.hbm %s0, %s200
          %s202 = sshll.u32 %s201, 4
          %s203 = int_to_ptr.hbm [resolvable:$true] %s202
          %s204 = sshll.u32 %s196, 4
          %s205 = int_to_ptr.vmem [resolvable:$true] %s204
          %210 = dma.hbm_to_vmem [thread:$0]  %s203, 256, %s205, %s193, 128, 128, 8
        $region32: #{tpu_custom_call.1} parent=27 // pred_fallthru
          _
        // Predicated region
        $region33: #{tpu_custom_call.1} parent=27 // pred_check
          %p211 = pneg %p66
        $region34: #{tpu_custom_call.1} parent=27 // pred_check_branch
          %213 = sbr.rel (%p211) target = $region36
        $region35: #{tpu_custom_call.1} parent=27 // pred_region
          %s214 = sand.u32 %s56, 1
          %s215 = scalar_lea.sflag [#allocation6], %s214
          %s216 = sand.u32 %s56, 1
          %s217 = smul.addr %s216, 16
          %s218 = scalar_lea.vmem [#allocation5], %s217
          %s219 = smul.u32 2, %s20
          %221 = vsyncadd %s215, 0
          %s222 = smul.addr %s219, 8
          %s223 = scalar_lea.hbm %s1, %s222
          %s224 = sshll.u32 %s223, 4
          %s225 = int_to_ptr.hbm [resolvable:$true] %s224
          %s226 = sshll.u32 %s218, 4
          %s227 = int_to_ptr.vmem [resolvable:$true] %s226
          %232 = dma.hbm_to_vmem [thread:$0]  %s225, 256, %s227, %s215, 128, 128, 8
        $region36: #{tpu_custom_call.1} parent=27 // pred_fallthru
          _
      $region28: #{tpu_custom_call.1} parent=5 // pred_fallthru
        _
      %p233 = scmp.le.s32.totalorder 1, %s20
      %p234 = scmp.lt.s32.totalorder %s20, 3
      %p235 = pnand %p233, %p234
      %p236 = pneg %p235
      // Predicated region
      $region37: #{tpu_custom_call.1} parent=5 // pred_check
        _
      $region38: #{tpu_custom_call.1} parent=5 // pred_check_branch
        %238 = sbr.rel (%p235) target = $region40
      $region39: #{tpu_custom_call.1} parent=5 // pred_region
        %s239 = ssub.s32 %s20, 1
        %s240 = sand.u32 %s33, 1
        %s241 = scalar_lea.sflag [#allocation3], %s240
        %s242 = sand.u32 %s33, 1
        %s243 = smul.addr %s242, 16
        %s244 = scalar_lea.vmem [#allocation2], %s243
        // Predicated region
        $region41: #{tpu_custom_call.1} parent=39 // pred_check
          %p245 = pneg %p46
        $region42: #{tpu_custom_call.1} parent=39 // pred_check_branch
          %247 = sbr.rel (%p245) target = $region44
        $region43: #{tpu_custom_call.1} parent=39 // pred_region
          %249 = dma.done %s241, 256
        $region44: #{tpu_custom_call.1} parent=39 // pred_fallthru
          _
        %s250 = sand.u32 %s59, 1
        %s251 = scalar_lea.sflag [#allocation6], %s250
        %s252 = sand.u32 %s59, 1
        %s253 = smul.addr %s252, 16
        %s254 = scalar_lea.vmem [#allocation5], %s253
        // Predicated region
        $region45: #{tpu_custom_call.1} parent=39 // pred_check
          %p255 = pneg %p72
        $region46: #{tpu_custom_call.1} parent=39 // pred_check_branch
          %257 = sbr.rel (%p255) target = $region48
        $region47: #{tpu_custom_call.1} parent=39 // pred_region
          %259 = dma.done %s251, 256
        $region48: #{tpu_custom_call.1} parent=39 // pred_fallthru
          _
        %s260 = sand.u32 %s33, 1
        %s261 = scalar_lea.sflag [#allocation3], %s260
        %s262 = sand.u32 %s33, 1
        %s263 = smul.addr %s262, 16
        %s264 = scalar_lea.vmem [#allocation2], %s263
        %p265 = pneg %p46
        %p266 = pneg %p43
        %s267 = sand.u32 %s59, 1
        %s268 = scalar_lea.sflag [#allocation6], %s267
        %s269 = sand.u32 %s59, 1
        %s270 = smul.addr %s269, 16
        %s271 = scalar_lea.vmem [#allocation5], %s270
        %p272 = pneg %p72
        %p273 = pneg %p69
        %p274 = pneg %p93
        %p275 = pneg %p90
        %p276 = pneg %p114
        %p277 = pneg %p111
        %p278 = pneg %p135
        %p279 = pneg %p132
        %p280 = pneg %p161
        %p281 = pneg %p158
        %s282 = sand.u32 %s148, 1
        %s283 = scalar_lea.sflag [#allocation4], %s282
        %s284 = sand.u32 %s148, 1
        %s285 = smul.addr %s284, 8
        %s286 = scalar_lea.vmem [#allocation7], %s285
        %s287 = smul.u32 2, %s25
        %s288 = smul.u32 2, %s25
        %s289 = smul.u32 2, %s25
        %v290 = vld [vmem:[%s244] sm:$0xff]
        %v291 = vld [vmem:[%s244 + $0x8] sm:$0xff]
        %v292 = vld [vmem:[%s254] sm:$0xff]
        %v293 = vld [vmem:[%s254 + $0x8] sm:$0xff]
        %v294 = vadd.f32 %v290, %v292
        %v295 = vadd.f32 %v291, %v293
        %v296 = vld [vmem:[%s2] sm:$0x1]
        %v298 = vperm.slane %v296, 0
        %v300 = vadd.f32 %v294, %v298
        %v301 = vadd.f32 %v295, %v298
        %vm302 = vcmask 261120
        %v303 = vsel %vm302, %v300, 0.0
        %304 = vadd.xlane.f32.xlu0 %v303
        %v305 = vpop.xlane.xlu0 %304
        %v306 = vsel %vm302, %v301, 0.0
        %307 = vadd.xlane.f32.xlu0 %v306
        %v308 = vpop.xlane.xlu0 %307
        %v309 = vrcp.pop 32.0
        %v310 = vmul.f32 32.0, %v309
        %v311 = vsub.f32 1.0, %v310
        %v312 = vmul.f32 %v309, %v311
        %v313 = vadd.f32 %v309, %v312
        %vm314 = vweird.f32 %v309
        %v315 = vsel %vm314, %v309, %v313
        %v316 = vmul.f32 %v305, %v315
        %v317 = vmul.f32 %v308, %v315
        %v318 = vsub.f32 %v300, %v316
        %v319 = vsub.f32 %v301, %v317
        %v320 = vmul.f32 %v318, %v318
        %v321 = vmul.f32 %v319, %v319
        %v322 = vsel %vm302, %v320, 0.0
        %323 = vadd.xlane.f32.xlu0 %v322
        %v324 = vpop.xlane.xlu0 %323
        %v325 = vsel %vm302, %v321, 0.0
        %326 = vadd.xlane.f32.xlu0 %v325
        %v327 = vpop.xlane.xlu0 %326
        %v328 = vmul.f32 %v324, %v315
        %v329 = vmul.f32 %v327, %v315
        %v330 = vadd.f32 %v328, 1e-05
        %v331 = vadd.f32 %v329, 1e-05
        %v332 = vrsqrt.pop %v330
        %v333 = vmul.f32 %v332, %v330
        %v334 = vmul.f32 %v333, %v332
        %v335 = vmul.f32 0.5, %v334
        %v336 = vsub.f32 1.5, %v335
        %v337 = vmul.f32 %v332, %v336
        %vm338 = vweird.f32 %v330
        %vm339 = vweird.f32 %v332
        %vm340 = vmor %vm338, %vm339
        %v341 = vsel %vm340, %v332, %v337
        %v342 = vrsqrt.pop %v331
        %v343 = vmul.f32 %v342, %v331
        %v344 = vmul.f32 %v343, %v342
        %v345 = vmul.f32 0.5, %v344
        %v346 = vsub.f32 1.5, %v345
        %v347 = vmul.f32 %v342, %v346
        %vm348 = vweird.f32 %v331
        %vm349 = vweird.f32 %v342
        %vm350 = vmor %vm348, %vm349
        %v351 = vsel %vm350, %v342, %v347
        %v352 = vmul.f32 %v318, %v341
        %v353 = vmul.f32 %v319, %v351
        %v354 = vld [vmem:[%s3] sm:$0x1]
        %v356 = vperm.slane %v354, 0
        %v358 = vmul.f32 %v352, %v356
        %v359 = vmul.f32 %v353, %v356
        %v360 = vld [vmem:[%s4] sm:$0x1]
        %v362 = vperm.slane %v360, 0
        %v364 = vadd.f32 %v358, %v362
        %v365 = vadd.f32 %v359, %v362
        %v366 = vpack.c.bf16 %v364, %v364
        %v367 = vpack.c.bf16 %v365, %v365
        %vm368 = vcmask 257024
        %369 = vst.msk [vmem:[%s286] sm:$0xf] %vm368, %v366
        %370 = vst.msk [vmem:[%s286 + $0x4] sm:$0xf] %vm368, %v367
        %s371 = sand.u32 %s148, 1
        %s372 = scalar_lea.sflag [#allocation4], %s371
        %s373 = sand.u32 %s148, 1
        %s374 = smul.addr %s373, 8
        %s375 = scalar_lea.vmem [#allocation7], %s374
        // Predicated region
        $region49: #{tpu_custom_call.1} parent=39 // pred_check
          %p376 = pneg %p158
        $region50: #{tpu_custom_call.1} parent=39 // pred_check_branch
          %378 = sbr.rel (%p376) target = $region52
        $region51: #{tpu_custom_call.1} parent=39 // pred_region
          %s379 = smul.u32 2, %s25
          %381 = vsyncadd %s372, 0
          %s382 = smul.addr %s379, 4
          %s383 = scalar_lea.hbm %s5, %s382
          %s384 = sshll.u32 %s375, 4
          %s385 = int_to_ptr.vmem [resolvable:$true] %s384
          %s386 = sshll.u32 %s383, 4
          %s387 = int_to_ptr.hbm [resolvable:$true] %s386
          %392 = dma.vmem_to_hbm [thread:$0]  %s385, 128, %s387, %s372, 64, 64, 4
        $region52: #{tpu_custom_call.1} parent=39 // pred_fallthru
          _
      $region40: #{tpu_custom_call.1} parent=5 // pred_fallthru
        _
      %p393 = scmp.le.s32.totalorder 2, %s20
      // Predicated region
      $region53: #{tpu_custom_call.1} parent=5 // pred_check
        %p394 = pneg %p393
      $region54: #{tpu_custom_call.1} parent=5 // pred_check_branch
        %396 = sbr.rel (%p394) target = $region56
      $region55: #{tpu_custom_call.1} parent=5 // pred_region
        %s397 = ssub.s32 %s20, 2
        // Predicated region
        $region57: #{tpu_custom_call.1} parent=55 // pred_check
          %p398 = pneg %p164
        $region58: #{tpu_custom_call.1} parent=55 // pred_check_branch
          %400 = sbr.rel (%p398) target = $region60
        $region59: #{tpu_custom_call.1} parent=55 // pred_region
          %s401 = sand.u32 %s149, 1
          %s402 = scalar_lea.sflag [#allocation4], %s401
          %s403 = sand.u32 %s149, 1
          %s404 = smul.addr %s403, 8
          %s405 = scalar_lea.vmem [#allocation7], %s404
          %407 = dma.done %s402, 128
        $region60: #{tpu_custom_call.1} parent=55 // pred_fallthru
          _
      $region56: #{tpu_custom_call.1} parent=5 // pred_fallthru
        _
    $region6: #{tpu_custom_call.1} parent=1 // loop_footer
      %s24 = sadd.s32 1, %s20
    $region7: #{tpu_custom_call.1} parent=1 // loop_footer_branch
      %19 = sbr.rel target = $region3
    $region8: #{tpu_custom_call.1} parent=1 // loop_exit
      _
    %408 = vsyncpa [#allocation3], 1
    %s409 = scalar_lea.sflag [#allocation3], 1
    %410 = vsyncpa %s409, 1
    %411 = vsyncpa [#allocation6], 1
    %s412 = scalar_lea.sflag [#allocation6], 1
    %413 = vsyncpa %s412, 1
    %414 = vsyncpa [#allocation4], 1
    %s415 = scalar_lea.sflag [#allocation4], 1
    %416 = vsyncpa %s415, 1

</llo_original>
